<compile_context>
chip_gen: v5e
topology: v5e:2x2
jax: 0.10.0
libtpu: 0.0.40
codegen_flags: <defaults>
</compile_context>

<pallas_src>
import jax
import jax.numpy as jnp
from jax.experimental import pallas as pl
from jax.experimental.pallas import tpu as pltpu


def _round_up(x, m):
    return (x + m - 1) // m * m


# --------------------------------------------------------------------------
# Kernels
# --------------------------------------------------------------------------

def _ffn_kernel(x_ref, w1_ref, b1_ref, w2_ref, b2_ref, o_ref):
    """Fully fused row slab: GELU(x @ w1 + b1) @ w2 + b2 (hidden VMEM-resident)."""
    x = x_ref[...]                                                    # (tm, dim_p)
    h = jnp.dot(x, w1_ref[...], preferred_element_type=jnp.float32)  # MXU, f32 acc
    h = h + b1_ref[...].astype(jnp.float32)
    h = jax.nn.gelu(h, approximate=True)                             # f32 elementwise
    y = jnp.dot(h.astype(w2_ref.dtype), w2_ref[...],
                preferred_element_type=jnp.float32)
    y = y + b2_ref[...].astype(jnp.float32)
    o_ref[...] = y.astype(o_ref.dtype)                               # lane-dense store


def _ffn_hidden_tiled_kernel(x_ref, w1_ref, b1_ref, w2_ref, b2_ref, o_ref, acc_ref):
    """Fallback: hidden tiled over an 'arbitrary' grid axis with f32 accumulator."""
    k = pl.program_id(1)

    @pl.when(k == 0)
    def _():
        acc_ref[...] = jnp.zeros_like(acc_ref)

    h = jnp.dot(x_ref[...], w1_ref[...], preferred_element_type=jnp.float32)
    h = h + b1_ref[...].astype(jnp.float32)
    h = jax.nn.gelu(h, approximate=True)                # GELU is elementwise in hidden
    acc_ref[...] += jnp.dot(h.astype(w2_ref.dtype), w2_ref[...],
                            preferred_element_type=jnp.float32)

    @pl.when(k == pl.num_programs(1) - 1)
    def _():
        o_ref[...] = (acc_ref[...] + b2_ref[...].astype(jnp.float32)).astype(o_ref.dtype)


# --------------------------------------------------------------------------
# Tiling helpers
# --------------------------------------------------------------------------

def _pick_row_tiling(m, mxu_dtype, target=512):
    """MXU-aligned row tile with an even grid (>= 2) — rows are padded to tm*grid."""
    min_rows = 16 if jnp.dtype(mxu_dtype) == jnp.dtype(jnp.bfloat16) else 8
    align = 128 if m >= 256 else min_rows
    grid_n = max(2, pl.cdiv(m, target))
    if grid_n % 2:
        grid_n += 1                      # even grid: keep both v7x TensorCores busy
    tm = _round_up(pl.cdiv(m, grid_n), align)
    return tm, grid_n


def _pick_hidden_tile(hid_p, cap=512):
    """Largest multiple-of-128 divisor of hid_p that is <= cap."""
    t = min(hid_p, cap)
    t -= t % 128
    while t > 128 and hid_p % t:
        t -= 128
    return max(t, 128)


# --------------------------------------------------------------------------
# Wrapper
# --------------------------------------------------------------------------

def feedforward(x, w1, b1, w2, b2, *, mxu_dtype=jnp.bfloat16, row_tile=None,
                hidden_tile=None, force_hidden_tiling=False):
    """y = GELU(x @ w1 + b1) @ w2 + b2   (Dropout p=0 -> identity).

    w1: (dim, hidden), w2: (hidden, dim) -- PyTorch weights pre-transposed.
    """
    orig_dtype = x.dtype
    b, n, dim = x.shape
    hidden = w1.shape[1]
    m = b * n

    # Lane-dense feature dims (multiples of 128) -> unmasked stores, full MXU tiles.
    dim_p = _round_up(dim, 128)
    hid_p = _round_up(hidden, 128)

    # Row tiling: MXU-aligned tm, even grid, rows padded to tm * grid_n.
    if row_tile is None:
        tm, grid_n = _pick_row_tiling(m, mxu_dtype)
    else:
        tm = row_tile
        grid_n = pl.cdiv(m, tm)
        if grid_n % 2:
            grid_n += 1
    m_p = tm * grid_n

    # Pad + cast operands (zero padding keeps the math exact; bf16 feeds the MXU).
    x2 = jnp.pad(x.reshape(m, dim).astype(mxu_dtype),
                 ((0, m_p - m), (0, dim_p - dim)))
    w1p = jnp.pad(w1.astype(mxu_dtype), ((0, dim_p - dim), (0, hid_p - hidden)))
    w2p = jnp.pad(w2.astype(mxu_dtype), ((0, hid_p - hidden), (0, dim_p - dim)))
    b1p = jnp.pad(b1.astype(jnp.float32), (0, hid_p - hidden)).reshape(1, hid_p)
    b2p = jnp.pad(b2.astype(jnp.float32), (0, dim_p - dim)).reshape(1, dim_p)

    mxu_bytes = jnp.dtype(mxu_dtype).itemsize
    out_bytes = jnp.dtype(orig_dtype).itemsize

    # VMEM footprint of the fused path (weights single-buffered, slabs x2 buffers).
    weight_bytes = 2 * dim_p * hid_p * mxu_bytes + (hid_p + dim_p) * 4
    slab_bytes = 2 * tm * dim_p * mxu_bytes + 2 * tm * dim_p * out_bytes
    fused_bytes = weight_bytes + slab_bytes + tm * hid_p * 4          # + f32 h temp

    use_hidden_tiling = force_hidden_tiling or fused_bytes > int(0.75 * 64 * 2**20)

    cost = pl.CostEstimate(
        flops=4 * m_p * dim_p * hid_p,
        transcendentals=m_p * hid_p,
        bytes_accessed=((m_p * dim_p + 2 * dim_p * hid_p) * mxu_bytes
                        + (hid_p + dim_p) * 4 + m_p * dim_p * out_bytes))

    resident = pl.Buffered(1)   # constant-index operands: single VMEM copy

    if not use_hidden_tiling:
        vmem_limit = int(min(64 * 2**20, max(32 * 2**20, 2 * fused_bytes)))
        out2 = pl.pallas_call(
            _ffn_kernel,
            out_shape=jax.ShapeDtypeStruct((m_p, dim_p), orig_dtype),
            grid=(grid_n,),
            in_specs=[
                pl.BlockSpec((tm, dim_p), lambda i: (i, 0)),      # x row slab (pipelined)
                pl.BlockSpec((dim_p, hid_p), lambda i: (0, 0), pipeline_mode=resident),
                pl.BlockSpec((1, hid_p), lambda i: (0, 0), pipeline_mode=resident),
                pl.BlockSpec((hid_p, dim_p), lambda i: (0, 0), pipeline_mode=resident),
                pl.BlockSpec((1, dim_p), lambda i: (0, 0), pipeline_mode=resident),
            ],
            out_specs=pl.BlockSpec((tm, dim_p), lambda i: (i, 0)),
            compiler_params=pltpu.CompilerParams(
                dimension_semantics=("parallel",),
                vmem_limit_bytes=vmem_limit),
            cost_estimate=cost,
        )(x2, w1p, b1p, w2p, b2p)
    else:
        tk = hidden_tile if hidden_tile is not None else _pick_hidden_tile(hid_p)
        assert hid_p % tk == 0 and tk % 128 == 0
        kn = hid_p // tk
        tiled_bytes = (4 * dim_p * tk * mxu_bytes + 2 * (tk + dim_p) * 4
                       + 2 * tm * dim_p * mxu_bytes + 2 * tm * dim_p * out_bytes
                       + tm * tk * 4 + tm * dim_p * 4)
        vmem_limit = int(min(64 * 2**20, max(32 * 2**20, 2 * tiled_bytes)))
        out2 = pl.pallas_call(
            _ffn_hidden_tiled_kernel,
            out_shape=jax.ShapeDtypeStruct((m_p, dim_p), orig_dtype),
            grid=(grid_n, kn),
            in_specs=[
                pl.BlockSpec((tm, dim_p), lambda i, k: (i, 0)),   # x slab, resident over k
                pl.BlockSpec((dim_p, tk), lambda i, k: (0, k)),   # w1 hidden chunk
                pl.BlockSpec((1, tk), lambda i, k: (0, k)),       # b1 chunk
                pl.BlockSpec((tk, dim_p), lambda i, k: (k, 0)),   # w2 hidden chunk
                pl.BlockSpec((1, dim_p), lambda i, k: (0, 0)),    # b2
            ],
            out_specs=pl.BlockSpec((tm, dim_p), lambda i, k: (i, 0)),
            scratch_shapes=[pltpu.VMEM((tm, dim_p), jnp.float32)],
            compiler_params=pltpu.CompilerParams(
                dimension_semantics=("parallel", "arbitrary"),
                vmem_limit_bytes=vmem_limit),
            cost_estimate=cost,
        )(x2, w1p, b1p, w2p, b2p)

    return out2[:m, :dim].reshape(b, n, dim)


def feedforward_ref(x, w1, b1, w2, b2):
    """Pure-JAX f32 reference mirroring the PyTorch forward (exact GELU, Dropout p=0)."""
    h = x @ w1 + b1[None, None, :]
    h = jax.nn.gelu(h, approximate=False)
    return h @ w2 + b2[None, None, :]


if __name__ == "__main__":
    key = jax.random.PRNGKey(0)
    k1, k2, k3, k4, k5 = jax.random.split(key, 5)

    # Small ViT-like shapes: batch=2, seq=8, dim=32, hidden=4*dim=128.
    b, n, dim, hidden = 2, 8, 32, 128
    x = jax.random.normal(k1, (b, n, dim), jnp.float32)
    # Weights stored pre-transposed vs PyTorch's (out, in) layout: W.T
    w1 = jax.random.normal(k2, (dim, hidden), jnp.float32) * 0.05
    b1 = jax.random.normal(k3, (hidden,), jnp.float32) * 0.05
    w2 = jax.random.normal(k4, (hidden, dim), jnp.float32) * 0.05
    b2 = jax.random.normal(k5, (dim,), jnp.float32) * 0.05

    ref = feedforward_ref(x, w1, b1, w2, b2)

    # 1) Fully fused path (weights VMEM-resident, hidden never leaves VMEM).
    out = jax.block_until_ready(feedforward(x, w1, b1, w2, b2))
    assert out.shape == (b, n, dim)
    assert jnp.allclose(out, ref, atol=2e-2, rtol=2e-2), "fused path mismatch"

    # 2) Hidden-tiled fallback path (v7x large-model layout), forced with 2 chunks.
    hidden2 = 256
    w1b = jax.random.normal(k2, (dim, hidden2), jnp.float32) * 0.05
    b1b = jax.random.normal(k3, (hidden2,), jnp.float32) * 0.05
    w2b = jax.random.normal(k4, (hidden2, dim), jnp.float32) * 0.05
    ref2 = feedforward_ref(x, w1b, b1b, w2b, b2)
    out2 = jax.block_until_ready(
        feedforward(x, w1b, b1b, w2b, b2, force_hidden_tiling=True, hidden_tile=128))
    assert out2.shape == (b, n, dim)
    assert jnp.allclose(out2, ref2, atol=2e-2, rtol=2e-2), "hidden-tiled path mismatch"

    print("KERNEL_OK")
</pallas_src>

<mosaic_0001>
module attributes {stable_mosaic.version = 11 : i64} {
  func.func @_ffn_kernel(%arg0: i32, %arg1: memref<16x128xbf16, #tpu.memory_space<vmem>>, %arg2: memref<128x128xbf16, #tpu.memory_space<vmem>>, %arg3: memref<1x128xf32, #tpu.memory_space<vmem>>, %arg4: memref<128x128xbf16, #tpu.memory_space<vmem>>, %arg5: memref<1x128xf32, #tpu.memory_space<vmem>>, %arg6: memref<16x128xf32, #tpu.memory_space<vmem>>) attributes {dimension_semantics = [#tpu.dimension_semantics<parallel>], iteration_bounds = array<i64: 2>, scalar_prefetch = 0 : i64, scratch_operands = 0 : i64, tpu.core_type = #tpu.core_type<tc>, window_params = [{transform_indices = @transform_0, window_bounds = array<i64: 16, 128>}, {pipeline_mode = #tpu.pipeline_mode<synchronous>, transform_indices = @transform_1, window_bounds = array<i64: 128, 128>}, {pipeline_mode = #tpu.pipeline_mode<synchronous>, transform_indices = @transform_2, window_bounds = array<i64: 1, 128>}, {pipeline_mode = #tpu.pipeline_mode<synchronous>, transform_indices = @transform_3, window_bounds = array<i64: 128, 128>}, {pipeline_mode = #tpu.pipeline_mode<synchronous>, transform_indices = @transform_4, window_bounds = array<i64: 1, 128>}, {transform_indices = @transform_5, window_bounds = array<i64: 16, 128>}]} {
    %c0 = arith.constant 0 : index
    %c0_0 = arith.constant 0 : index
    %0 = vector.load %arg1[%c0, %c0_0] : memref<16x128xbf16, #tpu.memory_space<vmem>>, vector<16x128xbf16>
    %c0_1 = arith.constant 0 : index
    %c0_2 = arith.constant 0 : index
    %1 = vector.load %arg2[%c0_1, %c0_2] : memref<128x128xbf16, #tpu.memory_space<vmem>>, vector<128x128xbf16>
    %cst = arith.constant dense<0.000000e+00> : vector<16x128xf32>
    %2 = tpu.matmul %0, %1, %cst {dimension_numbers = #tpu.dot_dimension_numbers<[1], [0], [0], [1], [0, 0, 1, 1], [], []>} : vector<16x128xbf16>, vector<128x128xbf16>, vector<16x128xf32> -> vector<16x128xf32>
    %c0_3 = arith.constant 0 : index
    %c0_4 = arith.constant 0 : index
    %3 = vector.load %arg3[%c0_3, %c0_4] : memref<1x128xf32, #tpu.memory_space<vmem>>, vector<1x128xf32>
    %4 = vector.broadcast %3 : vector<1x128xf32> to vector<16x128xf32>
    %5 = arith.addf %2, %4 : vector<16x128xf32>
    %6 = arith.mulf %5, %5 : vector<16x128xf32>
    %7 = arith.mulf %5, %6 : vector<16x128xf32>
    %cst_5 = arith.constant 4.471500e-02 : f32
    %8 = vector.broadcast %cst_5 : f32 to vector<16x128xf32>
    %9 = arith.mulf %8, %7 : vector<16x128xf32>
    %10 = arith.addf %5, %9 : vector<16x128xf32>
    %cst_6 = arith.constant 0.797884583 : f32
    %11 = vector.broadcast %cst_6 : f32 to vector<16x128xf32>
    %12 = arith.mulf %11, %10 : vector<16x128xf32>
    %13 = math.tanh %12 : vector<16x128xf32>
    %cst_7 = arith.constant 1.000000e+00 : f32
    %14 = vector.broadcast %cst_7 : f32 to vector<16x128xf32>
    %15 = arith.addf %14, %13 : vector<16x128xf32>
    %cst_8 = arith.constant 5.000000e-01 : f32
    %16 = vector.broadcast %cst_8 : f32 to vector<16x128xf32>
    %17 = arith.mulf %16, %15 : vector<16x128xf32>
    %18 = arith.mulf %5, %17 : vector<16x128xf32>
    %19 = arith.truncf %18 : vector<16x128xf32> to vector<16x128xbf16>
    %c0_9 = arith.constant 0 : index
    %c0_10 = arith.constant 0 : index
    %20 = vector.load %arg4[%c0_9, %c0_10] : memref<128x128xbf16, #tpu.memory_space<vmem>>, vector<128x128xbf16>
    %cst_11 = arith.constant dense<0.000000e+00> : vector<16x128xf32>
    %21 = tpu.matmul %19, %20, %cst_11 {dimension_numbers = #tpu.dot_dimension_numbers<[1], [0], [0], [1], [0, 0, 1, 1], [], []>} : vector<16x128xbf16>, vector<128x128xbf16>, vector<16x128xf32> -> vector<16x128xf32>
    %c0_12 = arith.constant 0 : index
    %c0_13 = arith.constant 0 : index
    %22 = vector.load %arg5[%c0_12, %c0_13] : memref<1x128xf32, #tpu.memory_space<vmem>>, vector<1x128xf32>
    %23 = vector.broadcast %22 : vector<1x128xf32> to vector<16x128xf32>
    %24 = arith.addf %21, %23 : vector<16x128xf32>
    %c0_14 = arith.constant 0 : index
    %c0_15 = arith.constant 0 : index
    %25 = vector.load %arg6[%c0_14, %c0_15] : memref<16x128xf32, #tpu.memory_space<vmem>>, vector<16x128xf32>
    tpu.vector_store %arg6[%c0_14, %c0_15], %24 {strides = array<i32>} : memref<16x128xf32, #tpu.memory_space<vmem>>, vector<16x128xf32>,
    return
  }
  func.func @transform_0(%arg0: i32) -> (i32, i32) {
    %c0_i32 = arith.constant 0 : i32
    %c0_i32_0 = arith.constant 0 : i32
    return %arg0, %c0_i32 : i32, i32
  }
  func.func @transform_1(%arg0: i32) -> (i32, i32) {
    %c0_i32 = arith.constant 0 : i32
    %c0_i32_0 = arith.constant 0 : i32
    %c0_i32_1 = arith.constant 0 : i32
    return %c0_i32, %c0_i32_0 : i32, i32
  }
  func.func @transform_2(%arg0: i32) -> (i32, i32) {
    %c0_i32 = arith.constant 0 : i32
    %c0_i32_0 = arith.constant 0 : i32
    %c0_i32_1 = arith.constant 0 : i32
    return %c0_i32, %c0_i32_0 : i32, i32
  }
  func.func @transform_3(%arg0: i32) -> (i32, i32) {
    %c0_i32 = arith.constant 0 : i32
    %c0_i32_0 = arith.constant 0 : i32
    %c0_i32_1 = arith.constant 0 : i32
    return %c0_i32, %c0_i32_0 : i32, i32
  }
  func.func @transform_4(%arg0: i32) -> (i32, i32) {
    %c0_i32 = arith.constant 0 : i32
    %c0_i32_0 = arith.constant 0 : i32
    %c0_i32_1 = arith.constant 0 : i32
    return %c0_i32, %c0_i32_0 : i32, i32
  }
  func.func @transform_5(%arg0: i32) -> (i32, i32) {
    %c0_i32 = arith.constant 0 : i32
    %c0_i32_0 = arith.constant 0 : i32
    return %arg0, %c0_i32 : i32, i32
  }
}

</mosaic_0001>

<llo_original>
// kernel: tpu_custom_call.1
$region0: #{tpu_custom_call.1}
  #allocation0 [shape = 'u32[]', space=smem, size = 0x4, offset = 0x4, fixed_abs, tag = 'smem constant byte address 0x4 - core index']
  #allocation1 [shape = 'u32[72,128]{1,0:T(1,128)}', space=vmem, size = 0x9000, scoped, tag = 'internal scratch']
  %s0 = inlined_call_operand.hbm [shape: bf16[32,128], index: 0, kind: input, shape index: {}]
  %s1 = inlined_call_operand.hbm [shape: bf16[128,128], index: 1, kind: input, shape index: {}]
  %s2 = inlined_call_operand.vmem [shape: f32[1,128], index: 2, kind: input, shape index: {}]
  %s3 = inlined_call_operand.hbm [shape: bf16[128,128], index: 3, kind: input, shape index: {}]
  %s4 = inlined_call_operand.vmem [shape: f32[1,128], index: 4, kind: input, shape index: {}]
  %s5 = inlined_call_operand.hbm [shape: f32[32,128], index: 5, kind: output, shape index: {}]
  %s6 = sld [smem:[#allocation0]]
  $region65: #{tpu_custom_call.1} parent=0
    _
  %s8 = ssub.s32 1, %s6
  %s9 = scalar_select 0, %s8, %s6
  $region1: #{tpu_custom_call.1} parent=0
    #allocation2 [shape = 'u8[8192]{0}', space=vmem, size = 0x2000, scoped, tag = 'input window, operand 0']
    #allocation3 [shape = 's32[2]{0}', space=sflag, size = 0x8, scoped, tag = 'scoped memory for tpu_custom_call.1']
    #allocation4 [shape = 's32[2]{0}', space=sflag, size = 0x8, scoped, tag = 'scoped memory for tpu_custom_call.1']
    #allocation5 [shape = 'u8[32768]{0}', space=vmem, size = 0x8000, scoped, tag = 'input window, operand 1, single buffered']
    #allocation6 [shape = 's32[1]{0}', space=sflag, size = 0x4, scoped, tag = 'scoped memory for tpu_custom_call.1']
    #allocation7 [shape = 'u8[32768]{0}', space=vmem, size = 0x8000, scoped, tag = 'input window, operand 3, single buffered']
    #allocation8 [shape = 'u8[16384]{0}', space=vmem, size = 0x4000, scoped, tag = 'output window, operand 0']
    %10 = vsyncpa [#allocation3], 0
    %s11 = scalar_lea.sflag [#allocation3], 1
    %12 = vsyncpa %s11, 0
    %13 = vsyncpa [#allocation6], 0
    %14 = vsyncpa [#allocation4], 0
    %s15 = scalar_lea.sflag [#allocation4], 1
    %16 = vsyncpa %s15, 0
    loop: start=0, step=1, limit=4
    $region2: #{tpu_custom_call.1} parent=1 // loop_pre_header
      _
    $region3: #{tpu_custom_call.1} parent=1 // loop_header
      %s18 = sphi 0, %s22
      %p19 = scmp.ge.s32.totalorder %s18, 4
      %s28 = sphi 0, %s30
      %s31 = sphi 0, %s28
      %s32 = sphi 0, %s31
      %s48 = sphi 0, %s32
      %s52 = sphi 0, %s52
      %s54 = sphi 0, %s52
      %s55 = sphi 0, %s54
      %s69 = sphi 0, %s55
      %s73 = sphi 0, %s73
      %s75 = sphi 0, %s73
      %s76 = sphi 0, %s75
      %s90 = sphi 0, %s76
      %s94 = sphi 0, %s94
      %s96 = sphi 0, %s94
      %s97 = sphi 0, %s96
      %s111 = sphi 0, %s97
      %s115 = sphi 0, %s115
      %s117 = sphi 0, %s115
      %s118 = sphi 0, %s117
      %s132 = sphi 0, %s118
      %s138 = sphi 0, %s140
      %s141 = sphi 0, %s138
      %s142 = sphi 0, %s141
      %s158 = sphi 0, %s142
    $region4: #{tpu_custom_call.1} parent=1 // loop_header_branch
      %21 = sbr.rel (%p19) target = $region8
    $region5: #{tpu_custom_call.1} parent=1 // loop_body
      %s23 = ssub.s32 %s18, 1
      %s24 = ssub.s32 %s18, 2
      %s25 = sadd.s32 %s18, 1
      %s26 = ssub.s32 %s18, %s25
      %p27 = scmp.eq.s32.totalorder %s26, 0
      %s29 = sadd.s32 %s28, 1
      %s30 = scalar_select %p27, %s28, %s29
      %p33 = pneg %p27
      %p34 = scmp.eq.s32.totalorder %s18, 1
      %p35 = por %p33, %p34
      %p36 = scmp.ne.s32.totalorder %s28, %s31
      %p37 = scmp.eq.s32.totalorder %s18, 0
      %p38 = por %p36, %p37
      %p39 = scmp.ne.s32.totalorder %s28, %s31
      %p40 = scmp.eq.s32.totalorder %s23, 1
      %p41 = por %p39, %p40
      %p42 = scmp.ne.s32.totalorder %s31, %s32
      %p43 = scmp.eq.s32.totalorder %s23, 0
      %p44 = por %p42, %p43
      %p45 = scmp.ne.s32.totalorder %s31, %s32
      %p46 = scmp.eq.s32.totalorder %s24, 1
      %p47 = por %p45, %p46
      %p49 = scmp.ne.s32.totalorder %s32, %s48
      %p50 = scmp.eq.s32.totalorder %s24, 0
      %p51 = por %p49, %p50
      %s53 = sadd.s32 %s52, 1
      %p56 = scmp.eq.s32.totalorder %s18, 1
      %p57 = scmp.ne.s32.totalorder %s52, %s54
      %p58 = scmp.eq.s32.totalorder %s18, 0
      %p59 = por %p57, %p58
      %p60 = scmp.ne.s32.totalorder %s52, %s54
      %p61 = scmp.eq.s32.totalorder %s23, 1
      %p62 = por %p60, %p61
      %p63 = scmp.ne.s32.totalorder %s54, %s55
      %p64 = scmp.eq.s32.totalorder %s23, 0
      %p65 = por %p63, %p64
      %p66 = scmp.ne.s32.totalorder %s54, %s55
      %p67 = scmp.eq.s32.totalorder %s24, 1
      %p68 = por %p66, %p67
      %p70 = scmp.ne.s32.totalorder %s55, %s69
      %p71 = scmp.eq.s32.totalorder %s24, 0
      %p72 = por %p70, %p71
      %s74 = sadd.s32 %s73, 1
      %p77 = scmp.eq.s32.totalorder %s18, 1
      %p78 = scmp.ne.s32.totalorder %s73, %s75
      %p79 = scmp.eq.s32.totalorder %s18, 0
      %p80 = por %p78, %p79
      %p81 = scmp.ne.s32.totalorder %s73, %s75
      %p82 = scmp.eq.s32.totalorder %s23, 1
      %p83 = por %p81, %p82
      %p84 = scmp.ne.s32.totalorder %s75, %s76
      %p85 = scmp.eq.s32.totalorder %s23, 0
      %p86 = por %p84, %p85
      %p87 = scmp.ne.s32.totalorder %s75, %s76
      %p88 = scmp.eq.s32.totalorder %s24, 1
      %p89 = por %p87, %p88
      %p91 = scmp.ne.s32.totalorder %s76, %s90
      %p92 = scmp.eq.s32.totalorder %s24, 0
      %p93 = por %p91, %p92
      %s95 = sadd.s32 %s94, 1
      %p98 = scmp.eq.s32.totalorder %s18, 1
      %p99 = scmp.ne.s32.totalorder %s94, %s96
      %p100 = scmp.eq.s32.totalorder %s18, 0
      %p101 = por %p99, %p100
      %p102 = scmp.ne.s32.totalorder %s94, %s96
      %p103 = scmp.eq.s32.totalorder %s23, 1
      %p104 = por %p102, %p103
      %p105 = scmp.ne.s32.totalorder %s96, %s97
      %p106 = scmp.eq.s32.totalorder %s23, 0
      %p107 = por %p105, %p106
      %p108 = scmp.ne.s32.totalorder %s96, %s97
      %p109 = scmp.eq.s32.totalorder %s24, 1
      %p110 = por %p108, %p109
      %p112 = scmp.ne.s32.totalorder %s97, %s111
      %p113 = scmp.eq.s32.totalorder %s24, 0
      %p114 = por %p112, %p113
      %s116 = sadd.s32 %s115, 1
      %p119 = scmp.eq.s32.totalorder %s18, 1
      %p120 = scmp.ne.s32.totalorder %s115, %s117
      %p121 = scmp.eq.s32.totalorder %s18, 0
      %p122 = por %p120, %p121
      %p123 = scmp.ne.s32.totalorder %s115, %s117
      %p124 = scmp.eq.s32.totalorder %s23, 1
      %p125 = por %p123, %p124
      %p126 = scmp.ne.s32.totalorder %s117, %s118
      %p127 = scmp.eq.s32.totalorder %s23, 0
      %p128 = por %p126, %p127
      %p129 = scmp.ne.s32.totalorder %s117, %s118
      %p130 = scmp.eq.s32.totalorder %s24, 1
      %p131 = por %p129, %p130
      %p133 = scmp.ne.s32.totalorder %s118, %s132
      %p134 = scmp.eq.s32.totalorder %s24, 0
      %p135 = por %p133, %p134
      %s136 = ssub.s32 %s18, %s25
      %p137 = scmp.eq.s32.totalorder %s136, 0
      %s139 = sadd.s32 %s138, 1
      %s140 = scalar_select %p137, %s138, %s139
      %p143 = pneg %p137
      %p144 = scmp.eq.s32.totalorder %s18, 1
      %p145 = por %p143, %p144
      %p146 = scmp.ne.s32.totalorder %s138, %s141
      %p147 = scmp.eq.s32.totalorder %s18, 0
      %p148 = por %p146, %p147
      %p149 = scmp.ne.s32.totalorder %s138, %s141
      %p150 = scmp.eq.s32.totalorder %s23, 1
      %p151 = por %p149, %p150
      %p152 = scmp.ne.s32.totalorder %s141, %s142
      %p153 = scmp.eq.s32.totalorder %s23, 0
      %p154 = por %p152, %p153
      %p155 = scmp.ne.s32.totalorder %s141, %s142
      %p156 = scmp.eq.s32.totalorder %s24, 1
      %p157 = por %p155, %p156
      %p159 = scmp.ne.s32.totalorder %s142, %s158
      %p160 = scmp.eq.s32.totalorder %s24, 0
      %p161 = por %p159, %p160
      %p162 = scmp.le.s32.totalorder 1, %s18
      %p163 = scmp.lt.s32.totalorder %s18, 3
      %p164 = pnand %p162, %p163
      %p165 = pneg %p164
      // Predicated region
      $region9: #{tpu_custom_call.1} parent=5 // pred_check
        _
      $region10: #{tpu_custom_call.1} parent=5 // pred_check_branch
        %167 = sbr.rel (%p164) target = $region12
      $region11: #{tpu_custom_call.1} parent=5 // pred_region
        %s168 = ssub.s32 %s18, 1
        // Predicated region
        $region13: #{tpu_custom_call.1} parent=11 // pred_check
          %p169 = pneg %p65
        $region14: #{tpu_custom_call.1} parent=11 // pred_check_branch
          %171 = sbr.rel (%p169) target = $region16
        $region15: #{tpu_custom_call.1} parent=11 // pred_region
          %173 = vsyncadd [#allocation6], 0
          %s174 = sshll.u32 %s1, 4
          %s175 = int_to_ptr.hbm [resolvable:$true] %s174
          %s176 = sshll.u32 [#allocation5], 4
          %s177 = int_to_ptr.vmem [resolvable:$true] %s176
          %182 = dma.hbm_to_vmem [thread:$0]  %s175, 1024, %s177, [#allocation6], 64, 64, 4
        $region16: #{tpu_custom_call.1} parent=11 // pred_fallthru
          _
        // Predicated region
        $region17: #{tpu_custom_call.1} parent=11 // pred_check
          %p183 = pneg %p86
        $region18: #{tpu_custom_call.1} parent=11 // pred_check_branch
          %185 = sbr.rel (%p183) target = $region20
        $region19: #{tpu_custom_call.1} parent=11 // pred_region
          _
        $region20: #{tpu_custom_call.1} parent=11 // pred_fallthru
          _
        // Predicated region
        $region21: #{tpu_custom_call.1} parent=11 // pred_check
          %p186 = pneg %p107
        $region22: #{tpu_custom_call.1} parent=11 // pred_check_branch
          %188 = sbr.rel (%p186) target = $region24
        $region23: #{tpu_custom_call.1} parent=11 // pred_region
          %190 = vsyncadd [#allocation6], 0
          %s191 = sshll.u32 %s3, 4
          %s192 = int_to_ptr.hbm [resolvable:$true] %s191
          %s193 = sshll.u32 [#allocation7], 4
          %s194 = int_to_ptr.vmem [resolvable:$true] %s193
          %199 = dma.hbm_to_vmem [thread:$0]  %s192, 1024, %s194, [#allocation6], 64, 64, 4
        $region24: #{tpu_custom_call.1} parent=11 // pred_fallthru
          _
        // Predicated region
        $region25: #{tpu_custom_call.1} parent=11 // pred_check
          %p200 = pneg %p128
        $region26: #{tpu_custom_call.1} parent=11 // pred_check_branch
          %202 = sbr.rel (%p200) target = $region28
        $region27: #{tpu_custom_call.1} parent=11 // pred_region
          _
        $region28: #{tpu_custom_call.1} parent=11 // pred_fallthru
          _
      $region12: #{tpu_custom_call.1} parent=5 // pred_fallthru
        _
      %p203 = scmp.lt.s32.totalorder %s18, 2
      // Predicated region
      $region29: #{tpu_custom_call.1} parent=5 // pred_check
        %p204 = pneg %p203
      $region30: #{tpu_custom_call.1} parent=5 // pred_check_branch
        %206 = sbr.rel (%p204) target = $region32
      $region31: #{tpu_custom_call.1} parent=5 // pred_region
        // Predicated region
        $region33: #{tpu_custom_call.1} parent=31 // pred_check
          %p207 = pneg %p38
        $region34: #{tpu_custom_call.1} parent=31 // pred_check_branch
          %209 = sbr.rel (%p207) target = $region36
        $region35: #{tpu_custom_call.1} parent=31 // pred_region
          %s210 = sand.u32 %s28, 1
          %s211 = scalar_lea.sflag [#allocation3], %s210
          %s212 = sand.u32 %s28, 1
          %s213 = smul.addr %s212, 8
          %s214 = scalar_lea.vmem [#allocation2], %s213
          %s215 = smul.u32 2, %s18
          %217 = vsyncadd %s211, 0
          %s218 = smul.addr %s215, 4
          %s219 = scalar_lea.hbm %s0, %s218
          %s220 = sshll.u32 %s219, 4
          %s221 = int_to_ptr.hbm [resolvable:$true] %s220
          %s222 = sshll.u32 %s214, 4
          %s223 = int_to_ptr.vmem [resolvable:$true] %s222
          %228 = dma.hbm_to_vmem [thread:$0]  %s221, 128, %s223, %s211, 64, 64, 4
        $region36: #{tpu_custom_call.1} parent=31 // pred_fallthru
          _
      $region32: #{tpu_custom_call.1} parent=5 // pred_fallthru
        _
      %p229 = scmp.le.s32.totalorder 1, %s18
      %p230 = scmp.lt.s32.totalorder %s18, 3
      %p231 = pnand %p229, %p230
      %p232 = pneg %p231
      // Predicated region
      $region37: #{tpu_custom_call.1} parent=5 // pred_check
        _
      $region38: #{tpu_custom_call.1} parent=5 // pred_check_branch
        %234 = sbr.rel (%p231) target = $region40
      $region39: #{tpu_custom_call.1} parent=5 // pred_region
        %s235 = ssub.s32 %s18, 1
        %s236 = sand.u32 %s31, 1
        %s237 = scalar_lea.sflag [#allocation3], %s236
        %s238 = sand.u32 %s31, 1
        %s239 = smul.addr %s238, 8
        %s240 = scalar_lea.vmem [#allocation2], %s239
        // Predicated region
        $region41: #{tpu_custom_call.1} parent=39 // pred_check
          %p241 = pneg %p44
        $region42: #{tpu_custom_call.1} parent=39 // pred_check_branch
          %243 = sbr.rel (%p241) target = $region44
        $region43: #{tpu_custom_call.1} parent=39 // pred_region
          %245 = dma.done %s237, 128
        $region44: #{tpu_custom_call.1} parent=39 // pred_fallthru
          _
        // Predicated region
        $region45: #{tpu_custom_call.1} parent=39 // pred_check
          %p246 = pneg %p65
        $region46: #{tpu_custom_call.1} parent=39 // pred_check_branch
          %248 = sbr.rel (%p246) target = $region48
        $region47: #{tpu_custom_call.1} parent=39 // pred_region
          %250 = dma.done [#allocation6], 1024
        $region48: #{tpu_custom_call.1} parent=39 // pred_fallthru
          _
        // Predicated region
        $region49: #{tpu_custom_call.1} parent=39 // pred_check
          %p251 = pneg %p107
        $region50: #{tpu_custom_call.1} parent=39 // pred_check_branch
          %253 = sbr.rel (%p251) target = $region52
        $region51: #{tpu_custom_call.1} parent=39 // pred_region
          %255 = dma.done [#allocation6], 1024
        $region52: #{tpu_custom_call.1} parent=39 // pred_fallthru
          _
        %s256 = sand.u32 %s31, 1
        %s257 = scalar_lea.sflag [#allocation3], %s256
        %s258 = sand.u32 %s31, 1
        %s259 = smul.addr %s258, 8
        %s260 = scalar_lea.vmem [#allocation2], %s259
        %p261 = pneg %p44
        %p262 = pneg %p41
        %p263 = pneg %p65
        %p264 = pneg %p62
        %p265 = pneg %p86
        %p266 = pneg %p83
        %p267 = pneg %p107
        %p268 = pneg %p104
        %p269 = pneg %p128
        %p270 = pneg %p125
        %p271 = pneg %p154
        %p272 = pneg %p151
        %s273 = sand.u32 %s141, 1
        %s274 = scalar_lea.sflag [#allocation4], %s273
        %s275 = sand.u32 %s141, 1
        %s276 = smul.addr %s275, 16
        %s277 = scalar_lea.vmem [#allocation8], %s276
        %s278 = smul.u32 2, %s23
        %s279 = smul.u32 2, %s23
        %v280 = vld [vmem:[%s240] sm:$0xf]
        %v281 = vld [vmem:[%s240 + $0x4] sm:$0xf]
        %v282 = vld [vmem:[#allocation5] sm:$0xf]
        %v283 = vld [vmem:[#allocation5 + $0x4] sm:$0xf]
        %v284 = vld [vmem:[#allocation5 + $0x8] sm:$0xf]
        %v285 = vld [vmem:[#allocation5 + $0xc] sm:$0xf]
        %v286 = vld [vmem:[#allocation5 + $0x10] sm:$0xf]
        %v287 = vld [vmem:[#allocation5 + $0x14] sm:$0xf]
        %v288 = vld [vmem:[#allocation5 + $0x18] sm:$0xf]
        %v289 = vld [vmem:[#allocation5 + $0x1c] sm:$0xf]
        %v290 = vld [vmem:[#allocation5 + $0x20] sm:$0xf]
        %v291 = vld [vmem:[#allocation5 + $0x24] sm:$0xf]
        %v292 = vld [vmem:[#allocation5 + $0x28] sm:$0xf]
        %v293 = vld [vmem:[#allocation5 + $0x2c] sm:$0xf]
        %v294 = vld [vmem:[#allocation5 + $0x30] sm:$0xf]
        %v295 = vld [vmem:[#allocation5 + $0x34] sm:$0xf]
        %v296 = vld [vmem:[#allocation5 + $0x38] sm:$0xf]
        %v297 = vld [vmem:[#allocation5 + $0x3c] sm:$0xf]
        %v298 = vld [vmem:[%s2] sm:$0x1]
        %v300 = vperm.slane %v298, 0
        %v304 = vunpack.c.l.b16 %v280
        %v305 = vunpack.c.l.b16 %v281
        %v306 = vpack.c.b16 %v305, %v304
        %v324 = vunpack.c.l.b16 %v282
        %v325 = vunpack.c.l.b16 %v283
        %v326 = vunpack.c.l.b16 %v284
        %v327 = vunpack.c.l.b16 %v285
        %v328 = vunpack.c.l.b16 %v286
        %v329 = vunpack.c.l.b16 %v287
        %v330 = vunpack.c.l.b16 %v288
        %v331 = vunpack.c.l.b16 %v289
        %v332 = vunpack.c.l.b16 %v290
        %v333 = vunpack.c.l.b16 %v291
        %v334 = vunpack.c.l.b16 %v292
        %v335 = vunpack.c.l.b16 %v293
        %v336 = vunpack.c.l.b16 %v294
        %v337 = vunpack.c.l.b16 %v295
        %v338 = vunpack.c.l.b16 %v296
        %v339 = vunpack.c.l.b16 %v297
        %v340 = vpack.c.b16 %v325, %v324
        %v341 = vpack.c.b16 %v327, %v326
        %v342 = vpack.c.b16 %v329, %v328
        %v343 = vpack.c.b16 %v331, %v330
        %v344 = vpack.c.b16 %v333, %v332
        %v345 = vpack.c.b16 %v335, %v334
        %v346 = vpack.c.b16 %v337, %v336
        %v347 = vpack.c.b16 %v339, %v338
        %356 = vmatpush.bf16.msra.mxu0 %v347
        %357 = vmatpush.bf16.msra.mxu0 %v346
        %358 = vmatpush.bf16.msra.mxu0 %v345
        %359 = vmatpush.bf16.msra.mxu0 %v344
        %360 = vmatpush.bf16.msra.mxu0 %v343
        %361 = vmatpush.bf16.msra.mxu0 %v342
        %362 = vmatpush.bf16.msra.mxu0 %v341
        %363 = vmatpush.bf16.msra.mxu0 %v340
        %364 = vmatmul.bf16.gmra.mxu0 %v306
        %v365 = vpop.f32.mrf.mxu0
        %v366 = vadd.f32 %v300, %v365
        %v367 = vpop.f32.mrf.mxu0
        %v368 = vadd.f32 %v300, %v367
        %369 = vdwg.mxu0
        %v370 = vmul.f32 %v366, %v366
        %v371 = vmul.f32 %v368, %v368
        %v372 = vmul.f32 %v366, %v370
        %v373 = vmul.f32 %v368, %v371
        %v374 = vmul.f32 %v372, 0.044715
        %v375 = vmul.f32 %v373, 0.044715
        %v376 = vadd.f32 %v366, %v374
        %v377 = vadd.f32 %v368, %v375
        %v378 = vmul.f32 %v376, 0.7978846
        %v379 = vmul.f32 %v377, 0.7978846
        %v380 = vtanh.pop %v378
        %v381 = vtanh.pop %v379
        %v382 = vadd.f32 %v380, 1.0
        %v383 = vadd.f32 %v381, 1.0
        %v384 = vmul.f32 %v382, 0.5
        %v385 = vmul.f32 %v383, 0.5
        %v386 = vmul.f32 %v366, %v384
        %v387 = vmul.f32 %v368, %v385
        %v388 = vpack.c.bf16 %v387, %v386
        %v389 = vld [vmem:[#allocation7] sm:$0xf]
        %v390 = vld [vmem:[#allocation7 + $0x4] sm:$0xf]
        %v391 = vld [vmem:[#allocation7 + $0x8] sm:$0xf]
        %v392 = vld [vmem:[#allocation7 + $0xc] sm:$0xf]
        %v393 = vld [vmem:[#allocation7 + $0x10] sm:$0xf]
        %v394 = vld [vmem:[#allocation7 + $0x14] sm:$0xf]
        %v395 = vld [vmem:[#allocation7 + $0x18] sm:$0xf]
        %v396 = vld [vmem:[#allocation7 + $0x1c] sm:$0xf]
        %v397 = vld [vmem:[#allocation7 + $0x20] sm:$0xf]
        %v398 = vld [vmem:[#allocation7 + $0x24] sm:$0xf]
        %v399 = vld [vmem:[#allocation7 + $0x28] sm:$0xf]
        %v400 = vld [vmem:[#allocation7 + $0x2c] sm:$0xf]
        %v401 = vld [vmem:[#allocation7 + $0x30] sm:$0xf]
        %v402 = vld [vmem:[#allocation7 + $0x34] sm:$0xf]
        %v403 = vld [vmem:[#allocation7 + $0x38] sm:$0xf]
        %v404 = vld [vmem:[#allocation7 + $0x3c] sm:$0xf]
        %v405 = vld [vmem:[%s4] sm:$0x1]
        %v407 = vperm.slane %v405, 0
        %v425 = vunpack.c.l.b16 %v389
        %v426 = vunpack.c.l.b16 %v390
        %v427 = vunpack.c.l.b16 %v391
        %v428 = vunpack.c.l.b16 %v392
        %v429 = vunpack.c.l.b16 %v393
        %v430 = vunpack.c.l.b16 %v394
        %v431 = vunpack.c.l.b16 %v395
        %v432 = vunpack.c.l.b16 %v396
        %v433 = vunpack.c.l.b16 %v397
        %v434 = vunpack.c.l.b16 %v398
        %v435 = vunpack.c.l.b16 %v399
        %v436 = vunpack.c.l.b16 %v400
        %v437 = vunpack.c.l.b16 %v401
        %v438 = vunpack.c.l.b16 %v402
        %v439 = vunpack.c.l.b16 %v403
        %v440 = vunpack.c.l.b16 %v404
        %v441 = vpack.c.b16 %v426, %v425
        %v442 = vpack.c.b16 %v428, %v427
        %v443 = vpack.c.b16 %v430, %v429
        %v444 = vpack.c.b16 %v432, %v431
        %v445 = vpack.c.b16 %v434, %v433
        %v446 = vpack.c.b16 %v436, %v435
        %v447 = vpack.c.b16 %v438, %v437
        %v448 = vpack.c.b16 %v440, %v439
        %457 = vmatpush.bf16.msra.mxu0 %v448
        %458 = vmatpush.bf16.msra.mxu0 %v447
        %459 = vmatpush.bf16.msra.mxu0 %v446
        %460 = vmatpush.bf16.msra.mxu0 %v445
        %461 = vmatpush.bf16.msra.mxu0 %v444
        %462 = vmatpush.bf16.msra.mxu0 %v443
        %463 = vmatpush.bf16.msra.mxu0 %v442
        %464 = vmatpush.bf16.msra.mxu0 %v441
        %465 = vmatmul.bf16.gmra.mxu0 %v388
        %v466 = vpop.f32.mrf.mxu0
        %v467 = vadd.f32 %v407, %v466
        %v468 = vpop.f32.mrf.mxu0
        %v469 = vadd.f32 %v407, %v468
        %470 = vdwg.mxu0
        %471 = vst [vmem:[%s277] sm:$0xff] %v467
        %472 = vst [vmem:[%s277 + $0x8] sm:$0xff] %v469
        %s473 = sand.u32 %s141, 1
        %s474 = scalar_lea.sflag [#allocation4], %s473
        %s475 = sand.u32 %s141, 1
        %s476 = smul.addr %s475, 16
        %s477 = scalar_lea.vmem [#allocation8], %s476
        // Predicated region
        $region53: #{tpu_custom_call.1} parent=39 // pred_check
          %p478 = pneg %p151
        $region54: #{tpu_custom_call.1} parent=39 // pred_check_branch
          %480 = sbr.rel (%p478) target = $region56
        $region55: #{tpu_custom_call.1} parent=39 // pred_region
          %s481 = smul.u32 2, %s23
          %483 = vsyncadd %s474, 0
          %s484 = smul.addr %s481, 8
          %s485 = scalar_lea.hbm %s5, %s484
          %s486 = sshll.u32 %s477, 4
          %s487 = int_to_ptr.vmem [resolvable:$true] %s486
          %s488 = sshll.u32 %s485, 4
          %s489 = int_to_ptr.hbm [resolvable:$true] %s488
          %494 = dma.vmem_to_hbm [thread:$0]  %s487, 256, %s489, %s474, 128, 128, 8
        $region56: #{tpu_custom_call.1} parent=39 // pred_fallthru
          _
      $region40: #{tpu_custom_call.1} parent=5 // pred_fallthru
        _
      %p495 = scmp.le.s32.totalorder 2, %s18
      // Predicated region
      $region57: #{tpu_custom_call.1} parent=5 // pred_check
        %p496 = pneg %p495
      $region58: #{tpu_custom_call.1} parent=5 // pred_check_branch
        %498 = sbr.rel (%p496) target = $region60
      $region59: #{tpu_custom_call.1} parent=5 // pred_region
        %s499 = ssub.s32 %s18, 2
        // Predicated region
        $region61: #{tpu_custom_call.1} parent=59 // pred_check
          %p500 = pneg %p157
        $region62: #{tpu_custom_call.1} parent=59 // pred_check_branch
          %502 = sbr.rel (%p500) target = $region64
        $region63: #{tpu_custom_call.1} parent=59 // pred_region
          %s503 = sand.u32 %s142, 1
          %s504 = scalar_lea.sflag [#allocation4], %s503
          %s505 = sand.u32 %s142, 1
          %s506 = smul.addr %s505, 16
          %s507 = scalar_lea.vmem [#allocation8], %s506
          %509 = dma.done %s504, 256
        $region64: #{tpu_custom_call.1} parent=59 // pred_fallthru
          _
      $region60: #{tpu_custom_call.1} parent=5 // pred_fallthru
        _
    $region6: #{tpu_custom_call.1} parent=1 // loop_footer
      %s22 = sadd.s32 1, %s18
    $region7: #{tpu_custom_call.1} parent=1 // loop_footer_branch
      %17 = sbr.rel target = $region3
    $region8: #{tpu_custom_call.1} parent=1 // loop_exit
      _
    %510 = vsyncpa [#allocation3], 1
    %s511 = scalar_lea.sflag [#allocation3], 1
    %512 = vsyncpa %s511, 1
    %513 = vsyncpa [#allocation6], 1
    %514 = vsyncpa [#allocation4], 1
    %s515 = scalar_lea.sflag [#allocation4], 1
    %516 = vsyncpa %s515, 1

</llo_original>
